<compile_context>
chip_gen: v5e
topology: v5e:2x2
jax: 0.10.0
libtpu: 0.0.40
codegen_flags: <defaults>
</compile_context>

<pallas_src>
import functools

import jax
import jax.numpy as jnp
from jax.experimental import pallas as pl
from jax.experimental.pallas import tpu as pltpu


# ----------------------------------------------------------------------------
# Kernel
# ----------------------------------------------------------------------------
def _rnn_fc_packed_kernel(xp_ref, wih_ref, brnn_ref, wfc_ref, bfc_ref, out_ref):
    """Fused packed RNN step + FC.

    Per grid step (all lane-dense):
      xp_ref  : (TG, 8E)  f32   -- 8 batch rows packed per physical row
      wih_ref : (8E, 8H)  bf16  -- 8-way block-diagonal of W_ih^T (resident)
      brnn_ref: (1, 8H)   f32   -- tile8(b_ih + b_hh)
      wfc_ref : (8H, 8O)  bf16  -- 8-way block-diagonal of W_fc^T (resident)
      bfc_ref : (1, 8O)   f32   -- tile8(b_fc)
      out_ref : (TG, 8O)  f32
    """
    xp = xp_ref[...].astype(jnp.bfloat16)            # in-vreg cast; DMA stayed f32
    pre = jnp.dot(xp, wih_ref[...], preferred_element_type=jnp.float32)
    hidden = jnp.tanh(pre + brnn_ref[...])           # f32 bias add + tanh, dense lanes
    out = jnp.dot(hidden.astype(jnp.bfloat16), wfc_ref[...],
                  preferred_element_type=jnp.float32)
    out_ref[...] = out + bfc_ref[...]


# ----------------------------------------------------------------------------
# Wrapper
# ----------------------------------------------------------------------------
def _round_up(n, m):
    return ((n + m - 1) // m) * m


def _cdiv(a, b):
    return (a + b - 1) // b


def _block_diag8(w):
    """(K, N) -> (8K, 8N) with 8 copies of w on the block diagonal."""
    k, n = w.shape
    eye8 = jnp.eye(8, dtype=w.dtype)
    return jnp.einsum("ij,kn->ikjn", eye8, w).reshape(8 * k, 8 * n)


@functools.partial(jax.jit, static_argnames=("embedding_dim", "tile_b_max"))
def rnn_for_text_forward(x, params, *, embedding_dim, tile_b_max=16384):
    """Pallas implementation of RNN_for_Text.forward.

    x:       any shape with numel divisible by embedding_dim (PyTorch .view(1,-1,E)).
    params:  dict with w_ih (H,E), w_hh (H,H), b_ih (H,), b_hh (H,),
             w_fc (O,H), b_fc (O,).
    returns: (1, B, O) float32, matching PyTorch's fc(hidden) output.

    tile_b_max is in batch rows; per-generation guidance: ~4-8K (v5e),
    8-16K (v6e), 16-32K (v7x).  The default 16384 (2 MiB f32 x-tile) keeps all
    three generations DMA-bound while fitting comfortably in scoped VMEM.
    """
    E = embedding_dim
    x2d = x.reshape(-1, E)                           # (B, E), input dtype preserved
    B = x2d.shape[0]
    H = params["w_ih"].shape[0]
    O = params["w_fc"].shape[0]

    # ---- packed-lane layout: 8 batch rows per physical row -------------------
    # Only pad when B % 8 != 0 or B < 64 (small/ragged batch).  This is the only
    # place x is ever copied; non-multiple-of-tile batches are handled by grid
    # overhang below, with no copy.
    Bp = max(_round_up(B, 8), 64)
    if Bp != B:
        x2d = jnp.pad(x2d, ((0, Bp - B), (0, 0)))
    G = Bp // 8                                      # packed rows
    xp = x2d.reshape(G, 8 * E)                       # free (row-major identity)

    # Tiny constant-folded packed parameters (~160 KiB total).
    wih_blk = _block_diag8(params["w_ih"].T).astype(jnp.bfloat16)      # (8E, 8H)
    wfc_blk = _block_diag8(params["w_fc"].T).astype(jnp.bfloat16)      # (8H, 8O)
    b_rnn = jnp.tile((params["b_ih"] + params["b_hh"]).astype(jnp.float32),
                     8).reshape(1, 8 * H)
    b_fc = jnp.tile(params["b_fc"].astype(jnp.float32), 8).reshape(1, 8 * O)

    # ---- batch tile selection (packed rows; 1 packed row = 8 batch rows) -----
    tg_max = max(8, (int(tile_b_max) // 64) * 8)     # multiple of 8 packed rows
    TG = min(tg_max, _round_up(G, 8))
    if G > 8 and _cdiv(G, TG) < 2:
        # Keep >= 2 grid steps: shards across TCs on v7x and lets the input
        # double buffer overlap DMA with compute.
        TG = _round_up(_cdiv(G, 2), 8)
    grid = (_cdiv(G, TG),)                           # ceil-div: tail block overhangs

    # ---- explicit VMEM budget + scheduler cost hint ---------------------------
    x_blk_bytes = TG * 8 * E * x2d.dtype.itemsize
    o_blk_bytes = TG * 8 * O * 4
    w_bytes = (8 * E * 8 * H + 8 * H * 8 * O) * 2 + (8 * H + 8 * O) * 4
    vmem_limit = 2 * (x_blk_bytes + o_blk_bytes) + 2 * w_bytes + (8 << 20)
    vmem_limit = int(min(max(vmem_limit, 16 << 20), 100 << 20))
    cost = pl.CostEstimate(
        flops=int(2 * G * (8 * E) * (8 * H) + 2 * G * (8 * H) * (8 * O)),
        transcendentals=int(G * 8 * H),
        bytes_accessed=int(xp.size * xp.dtype.itemsize + G * 8 * O * 4 + w_bytes),
    )

    outp = pl.pallas_call(
        _rnn_fc_packed_kernel,
        out_shape=jax.ShapeDtypeStruct((G, 8 * O), jnp.float32),
        grid_spec=pltpu.PrefetchScalarGridSpec(
            num_scalar_prefetch=0,
            grid=grid,
            in_specs=[
                pl.BlockSpec((TG, 8 * E), lambda i: (i, 0)),     # x tile (pipelined)
                pl.BlockSpec((8 * E, 8 * H), lambda i: (0, 0)),  # block-diag W_ih^T
                pl.BlockSpec((1, 8 * H), lambda i: (0, 0)),      # fused RNN bias
                pl.BlockSpec((8 * H, 8 * O), lambda i: (0, 0)),  # block-diag W_fc^T
                pl.BlockSpec((1, 8 * O), lambda i: (0, 0)),      # fc bias
            ],
            out_specs=pl.BlockSpec((TG, 8 * O), lambda i: (i, 0)),
        ),
        compiler_params=pltpu.CompilerParams(
            dimension_semantics=("parallel",),       # batch tiles are independent
            vmem_limit_bytes=vmem_limit,
        ),
        cost_estimate=cost,
    )(xp, wih_blk, b_rnn, wfc_blk, b_fc)

    out2d = outp.reshape(Bp, O)                      # free (row-major identity)
    if Bp != B:
        out2d = out2d[:B]
    return out2d.reshape(1, B, O)


# ----------------------------------------------------------------------------
# Parameter init + references (for the self-test)
# ----------------------------------------------------------------------------
def init_params(key, embedding_dim, hidden_dim, output_dim):
    """Deterministic init mimicking PyTorch's U(-1/sqrt(fan), 1/sqrt(fan))."""
    ks = jax.random.split(key, 6)
    k_rnn = 1.0 / jnp.sqrt(hidden_dim)
    k_fc = 1.0 / jnp.sqrt(hidden_dim)
    u = lambda k, shape, bound: jax.random.uniform(
        k, shape, dtype=jnp.float32, minval=-bound, maxval=bound)
    return {
        "w_ih": u(ks[0], (hidden_dim, embedding_dim), k_rnn),
        "w_hh": u(ks[1], (hidden_dim, hidden_dim), k_rnn),
        "b_ih": u(ks[2], (hidden_dim,), k_rnn),
        "b_hh": u(ks[3], (hidden_dim,), k_rnn),
        "w_fc": u(ks[4], (output_dim, hidden_dim), k_fc),
        "b_fc": u(ks[5], (output_dim,), k_fc),
    }


def _reference_forward_f32(x, params, embedding_dim):
    """Pure-JAX f32 reference reproducing the PyTorch math."""
    x2d = x.reshape(-1, embedding_dim).astype(jnp.float32)
    hidden = jnp.tanh(x2d @ params["w_ih"].T + params["b_ih"] + params["b_hh"])
    out = hidden @ params["w_fc"].T + params["b_fc"]
    return out[None, :, :]


def _reference_forward_bf16_path(x, params, embedding_dim):
    """Reference using the same bf16-operand / f32-accumulate path as the kernel."""
    x2d = x.reshape(-1, embedding_dim).astype(jnp.bfloat16)
    wih_t = params["w_ih"].T.astype(jnp.bfloat16)
    wfc_t = params["w_fc"].T.astype(jnp.bfloat16)
    b_rnn = (params["b_ih"] + params["b_hh"]).astype(jnp.float32)
    pre = jnp.dot(x2d, wih_t, preferred_element_type=jnp.float32) + b_rnn
    hidden = jnp.tanh(pre)
    out = jnp.dot(hidden.astype(jnp.bfloat16), wfc_t,
                  preferred_element_type=jnp.float32) + params["b_fc"]
    return out[None, :, :]


def _check(name, out, x, params, embedding_dim):
    ref_b = _reference_forward_bf16_path(x, params, embedding_dim)
    ref_f = _reference_forward_f32(x, params, embedding_dim)
    assert jnp.allclose(out, ref_b, atol=5e-3, rtol=5e-3), (
        f"{name}: mismatch vs bf16-path reference")
    assert jnp.allclose(out, ref_f, atol=5e-2, rtol=5e-2), (
        f"{name}: mismatch vs f32 reference")


# ----------------------------------------------------------------------------
# Self-test
# ----------------------------------------------------------------------------
if __name__ == "__main__":
    EMBEDDING_DIM = 32
    HIDDEN_DIM = 32
    OUTPUT_DIM = 16

    key = jax.random.PRNGKey(0)
    k1, k2, k3, kp = jax.random.split(key, 4)
    params = init_params(kp, EMBEDDING_DIM, HIDDEN_DIM, OUTPUT_DIM)

    # Case 1: tiny input (2, 4, 32) -> B = 8; exercises the small-batch pad path.
    x_small = jax.random.normal(k1, (2, 4, EMBEDDING_DIM), dtype=jnp.float32)
    out_s = jax.block_until_ready(
        rnn_for_text_forward(x_small, params, embedding_dim=EMBEDDING_DIM))
    assert out_s.shape == (1, 8, OUTPUT_DIM), out_s.shape
    _check("small", out_s, x_small, params, EMBEDDING_DIM)

    # Case 2: B = 300 (not a multiple of 8) -> pad-to-304 fallback plus a 2-step
    # grid whose tail block overhangs (masked, no extra copy for the tile tail).
    x_mid = jax.random.normal(k2, (3, 100, EMBEDDING_DIM), dtype=jnp.float32)
    out_m = jax.block_until_ready(
        rnn_for_text_forward(x_mid, params, embedding_dim=EMBEDDING_DIM))
    assert out_m.shape == (1, 300, OUTPUT_DIM), out_m.shape
    _check("mid", out_m, x_mid, params, EMBEDDING_DIM)

    # Case 3: B = 512 with a small tile cap -> 4-step pipelined grid, no pad,
    # no output slice (fully copy-free wrapper path).
    x_big = jax.random.normal(k3, (4, 128, EMBEDDING_DIM), dtype=jnp.float32)
    out_b = jax.block_until_ready(
        rnn_for_text_forward(x_big, params, embedding_dim=EMBEDDING_DIM,
                             tile_b_max=128))
    assert out_b.shape == (1, 512, OUTPUT_DIM), out_b.shape
    _check("big", out_b, x_big, params, EMBEDDING_DIM)

    print("KERNEL_OK")
</pallas_src>

<mosaic_0001>
module attributes {stable_mosaic.version = 11 : i64} {
  func.func @_rnn_fc_packed_kernel(%arg0: i32, %arg1: memref<8x256xf32, #tpu.memory_space<vmem>>, %arg2: memref<256x256xbf16, #tpu.memory_space<vmem>>, %arg3: memref<1x256xf32, #tpu.memory_space<vmem>>, %arg4: memref<256x128xbf16, #tpu.memory_space<vmem>>, %arg5: memref<1x128xf32, #tpu.memory_space<vmem>>, %arg6: memref<8x128xf32, #tpu.memory_space<vmem>>) attributes {dimension_semantics = [#tpu.dimension_semantics<parallel>], iteration_bounds = array<i64: 1>, scalar_prefetch = 0 : i64, scratch_operands = 0 : i64, tpu.core_type = #tpu.core_type<tc>, window_params = [{transform_indices = @transform_0, window_bounds = array<i64: 8, 256>}, {pipeline_mode = #tpu.pipeline_mode<synchronous>, transform_indices = @transform_1, window_bounds = array<i64: 256, 256>}, {pipeline_mode = #tpu.pipeline_mode<synchronous>, transform_indices = @transform_2, window_bounds = array<i64: 1, 256>}, {pipeline_mode = #tpu.pipeline_mode<synchronous>, transform_indices = @transform_3, window_bounds = array<i64: 256, 128>}, {pipeline_mode = #tpu.pipeline_mode<synchronous>, transform_indices = @transform_4, window_bounds = array<i64: 1, 128>}, {transform_indices = @transform_5, window_bounds = array<i64: 8, 128>}]} {
    %c0 = arith.constant 0 : index
    %c0_0 = arith.constant 0 : index
    %0 = vector.load %arg1[%c0, %c0_0] : memref<8x256xf32, #tpu.memory_space<vmem>>, vector<8x256xf32>
    %1 = arith.truncf %0 : vector<8x256xf32> to vector<8x256xbf16>
    %c0_1 = arith.constant 0 : index
    %c0_2 = arith.constant 0 : index
    %2 = vector.load %arg2[%c0_1, %c0_2] : memref<256x256xbf16, #tpu.memory_space<vmem>>, vector<256x256xbf16>
    %cst = arith.constant dense<0.000000e+00> : vector<8x256xf32>
    %3 = tpu.matmul %1, %2, %cst {dimension_numbers = #tpu.dot_dimension_numbers<[1], [0], [0], [1], [0, 0, 1, 1], [], []>} : vector<8x256xbf16>, vector<256x256xbf16>, vector<8x256xf32> -> vector<8x256xf32>
    %c0_3 = arith.constant 0 : index
    %c0_4 = arith.constant 0 : index
    %4 = vector.load %arg3[%c0_3, %c0_4] : memref<1x256xf32, #tpu.memory_space<vmem>>, vector<1x256xf32>
    %5 = vector.broadcast %4 : vector<1x256xf32> to vector<8x256xf32>
    %6 = arith.addf %3, %5 : vector<8x256xf32>
    %7 = math.tanh %6 : vector<8x256xf32>
    %8 = arith.truncf %7 : vector<8x256xf32> to vector<8x256xbf16>
    %c0_5 = arith.constant 0 : index
    %c0_6 = arith.constant 0 : index
    %9 = vector.load %arg4[%c0_5, %c0_6] : memref<256x128xbf16, #tpu.memory_space<vmem>>, vector<256x128xbf16>
    %cst_7 = arith.constant dense<0.000000e+00> : vector<8x128xf32>
    %10 = tpu.matmul %8, %9, %cst_7 {dimension_numbers = #tpu.dot_dimension_numbers<[1], [0], [0], [1], [0, 0, 1, 1], [], []>} : vector<8x256xbf16>, vector<256x128xbf16>, vector<8x128xf32> -> vector<8x128xf32>
    %c0_8 = arith.constant 0 : index
    %c0_9 = arith.constant 0 : index
    %11 = vector.load %arg5[%c0_8, %c0_9] : memref<1x128xf32, #tpu.memory_space<vmem>>, vector<1x128xf32>
    %12 = vector.broadcast %11 : vector<1x128xf32> to vector<8x128xf32>
    %13 = arith.addf %10, %12 : vector<8x128xf32>
    %c0_10 = arith.constant 0 : index
    %c0_11 = arith.constant 0 : index
    %14 = vector.load %arg6[%c0_10, %c0_11] : memref<8x128xf32, #tpu.memory_space<vmem>>, vector<8x128xf32>
    tpu.vector_store %arg6[%c0_10, %c0_11], %13 {strides = array<i32>} : memref<8x128xf32, #tpu.memory_space<vmem>>, vector<8x128xf32>,
    return
  }
  func.func @transform_0(%arg0: i32) -> (i32, i32) {
    %c0_i32 = arith.constant 0 : i32
    %c0_i32_0 = arith.constant 0 : i32
    return %arg0, %c0_i32 : i32, i32
  }
  func.func @transform_1(%arg0: i32) -> (i32, i32) {
    %c0_i32 = arith.constant 0 : i32
    %c0_i32_0 = arith.constant 0 : i32
    %c0_i32_1 = arith.constant 0 : i32
    return %c0_i32, %c0_i32_0 : i32, i32
  }
  func.func @transform_2(%arg0: i32) -> (i32, i32) {
    %c0_i32 = arith.constant 0 : i32
    %c0_i32_0 = arith.constant 0 : i32
    %c0_i32_1 = arith.constant 0 : i32
    return %c0_i32, %c0_i32_0 : i32, i32
  }
  func.func @transform_3(%arg0: i32) -> (i32, i32) {
    %c0_i32 = arith.constant 0 : i32
    %c0_i32_0 = arith.constant 0 : i32
    %c0_i32_1 = arith.constant 0 : i32
    return %c0_i32, %c0_i32_0 : i32, i32
  }
  func.func @transform_4(%arg0: i32) -> (i32, i32) {
    %c0_i32 = arith.constant 0 : i32
    %c0_i32_0 = arith.constant 0 : i32
    %c0_i32_1 = arith.constant 0 : i32
    return %c0_i32, %c0_i32_0 : i32, i32
  }
  func.func @transform_5(%arg0: i32) -> (i32, i32) {
    %c0_i32 = arith.constant 0 : i32
    %c0_i32_0 = arith.constant 0 : i32
    return %arg0, %c0_i32 : i32, i32
  }
}

</mosaic_0001>

<llo_original>
// kernel: tile.13
$region0: #{tile.13}
  #allocation0 [shape = 's32[1]{0}', space=sflag, size = 0x4, scoped, tag = 'scoped memory for tile.13']
  %s0 = inlined_call_operand.vmem [shape: f32[32], index: 0, kind: input, shape index: {}]
  %s1 = inlined_call_operand.vmem [shape: f32[8,32], index: 1, kind: output, shape index: {}]
  // Predicated region
  $region2: #{tile.13} parent=0 // pred_check
    _
  $region3: #{tile.13} parent=0 // pred_check_branch
    %3 = sbr.rel (0) target = $region5
  $region4: #{tile.13} parent=0 // pred_region
    _
  $region5: #{tile.13} parent=0 // pred_fallthru
    _
  %v4 = vld [vmem:[%s0] ss:$0 sm:$0xff]
  %5 = vst [vmem:[%s1] sm:$0xff] %v4

// kernel: tile.14
$region0: #{tile.14}
  %s0 = inlined_call_operand.vmem [shape: f32[8,32], index: 0, kind: input, shape index: {}]
  %s1 = inlined_call_operand.vmem [shape: f32[1,256], index: 1, kind: output, shape index: {}]
  $region1: #{tile.14} parent=0
    #allocation0 [shape = 'u8[8192]{0}', space=vmem, size = 0x2000, scoped, tag = 'scoped mem for output reshape']
    %s2 = smov 3
    %v3 = vld [vmem:[%s0] ss:$4 sm:%s2]
    %vm4 = vcmask 261120
    %5 = vst.msk [vmem:[#allocation0] ss:$8 sm:$0x3] %vm4, %v3
    %s6 = scalar_lea.vmem %s0, 3
    %s7 = smov 3
    %v8 = vld [vmem:[%s6] ss:$4 sm:%s7]
    %9 = vrot.lane.b32.xlu0 %v8, 96
    %v10 = vpop.permute.xlu0 %9
    %vm11 = vcmask 1048320
    %12 = vst.msk [vmem:[#allocation0] ss:$8 sm:$0x3] %vm11, %v10
    %s13 = scalar_lea.vmem %s0, 2
    %s14 = smov 3
    %v15 = vld [vmem:[%s13] ss:$4 sm:%s14]
    %16 = vrot.lane.b32.xlu0 %v15, 64
    %v17 = vpop.permute.xlu0 %16
    %vm18 = vcmask 785920
    %19 = vst.msk [vmem:[#allocation0] ss:$8 sm:$0x3] %vm18, %v17
    %s20 = scalar_lea.vmem %s0, 1
    %s21 = smov 3
    %v22 = vld [vmem:[%s20] ss:$4 sm:%s21]
    %23 = vrot.lane.b32.xlu0 %v22, 32
    %v24 = vpop.permute.xlu0 %23
    %vm25 = vcmask 523520
    %26 = vst.msk [vmem:[#allocation0] ss:$8 sm:$0x3] %vm25, %v24
    %s28 = ssub.s32 2, 1
    %v29 = vld [vmem:[#allocation0] sm:%s28]
    %s31 = ssub.s32 2, 1
    %32 = vst [vmem:[%s1] sm:%s31] %v29
    %s33 = scalar_lea.vmem [#allocation0], 8
    %v34 = vld [vmem:[%s33] sm:%s28]
    %s36 = ssub.s32 2, 1
    %s37 = scalar_lea.vmem %s1, 1
    %38 = vst [vmem:[%s37] sm:%s36] %v34

// kernel: tile.18
$region0: #{tile.18}
  #allocation0 [shape = 's32[1]{0}', space=sflag, size = 0x4, scoped, tag = 'scoped memory for tile.18']
  %s0 = inlined_call_operand.vmem [shape: f32[16], index: 0, kind: input, shape index: {}]
  %s1 = inlined_call_operand.vmem [shape: f32[8,16], index: 1, kind: output, shape index: {}]
  // Predicated region
  $region2: #{tile.18} parent=0 // pred_check
    _
  $region3: #{tile.18} parent=0 // pred_check_branch
    %3 = sbr.rel (0) target = $region5
  $region4: #{tile.18} parent=0 // pred_region
    _
  $region5: #{tile.18} parent=0 // pred_fallthru
    _
  %v4 = vld [vmem:[%s0] ss:$0 sm:$0xff]
  %5 = vst [vmem:[%s1] sm:$0xff] %v4

// kernel: tile.19
$region0: #{tile.19}
  %s0 = inlined_call_operand.vmem [shape: f32[8,16], index: 0, kind: input, shape index: {}]
  %s1 = inlined_call_operand.vmem [shape: f32[1,128], index: 1, kind: output, shape index: {}]
  $region1: #{tile.19} parent=0
    #allocation0 [shape = 'u8[4096]{0}', space=vmem, size = 0x1000, scoped, tag = 'scoped mem for output reshape']
    %v2 = vld [vmem:[%s0] sm:$0x1]
    %vm3 = vcmask 130048
    %4 = vst.msk [vmem:[#allocation0] sm:$0x1] %vm3, %v2
    %s5 = scalar_lea.vmem %s0, 7
    %v6 = vld [vmem:[%s5] sm:$0x1]
    %7 = vrot.lane.b32.xlu0 %v6, 112
    %v8 = vpop.permute.xlu0 %7
    %vm9 = vcmask 1048448
    %10 = vst.msk [vmem:[#allocation0] sm:$0x1] %vm9, %v8
    %s11 = scalar_lea.vmem %s0, 6
    %v12 = vld [vmem:[%s11] sm:$0x1]
    %13 = vrot.lane.b32.xlu0 %v12, 96
    %v14 = vpop.permute.xlu0 %13
    %vm15 = vcmask 917248
    %16 = vst.msk [vmem:[#allocation0] sm:$0x1] %vm15, %v14
    %s17 = scalar_lea.vmem %s0, 5
    %v18 = vld [vmem:[%s17] sm:$0x1]
    %19 = vrot.lane.b32.xlu0 %v18, 80
    %v20 = vpop.permute.xlu0 %19
    %vm21 = vcmask 786048
    %22 = vst.msk [vmem:[#allocation0] sm:$0x1] %vm21, %v20
    %s23 = scalar_lea.vmem %s0, 4
    %v24 = vld [vmem:[%s23] sm:$0x1]
    %25 = vrot.lane.b32.xlu0 %v24, 64
    %v26 = vpop.permute.xlu0 %25
    %vm27 = vcmask 654848
    %28 = vst.msk [vmem:[#allocation0] sm:$0x1] %vm27, %v26
    %s29 = scalar_lea.vmem %s0, 3
    %v30 = vld [vmem:[%s29] sm:$0x1]
    %31 = vrot.lane.b32.xlu0 %v30, 48
    %v32 = vpop.permute.xlu0 %31
    %vm33 = vcmask 523648
    %34 = vst.msk [vmem:[#allocation0] sm:$0x1] %vm33, %v32
    %s35 = scalar_lea.vmem %s0, 2
    %v36 = vld [vmem:[%s35] sm:$0x1]
    %37 = vrot.lane.b32.xlu0 %v36, 32
    %v38 = vpop.permute.xlu0 %37
    %vm39 = vcmask 392448
    %40 = vst.msk [vmem:[#allocation0] sm:$0x1] %vm39, %v38
    %s41 = scalar_lea.vmem %s0, 1
    %v42 = vld [vmem:[%s41] sm:$0x1]
    %43 = vrot.lane.b32.xlu0 %v42, 16
    %v44 = vpop.permute.xlu0 %43
    %vm45 = vcmask 261248
    %46 = vst.msk [vmem:[#allocation0] sm:$0x1] %vm45, %v44
    %s48 = ssub.s32 2, 1
    %v49 = vld [vmem:[#allocation0] sm:%s48]
    %s51 = ssub.s32 2, 1
    %52 = vst [vmem:[%s1] sm:%s51] %v49

// kernel: rnn_for_text_forward.1
$region0: #{rnn_for_text_forward.1}
  #allocation0 [shape = 'u32[]', space=smem, size = 0x4, offset = 0x4, fixed_abs, tag = 'smem constant byte address 0x4 - core index']
  #allocation1 [shape = 'u32[72,128]{1,0:T(1,128)}', space=vmem, size = 0x9000, scoped, tag = 'internal scratch']
  %s0 = inlined_call_operand.vmem [shape: f32[8,256], index: 0, kind: input, shape index: {}]
  %s1 = inlined_call_operand.vmem [shape: bf16[256,256], index: 1, kind: input, shape index: {}]
  %s2 = inlined_call_operand.vmem [shape: f32[1,256], index: 2, kind: input, shape index: {}]
  %s3 = inlined_call_operand.vmem [shape: bf16[256,128], index: 3, kind: input, shape index: {}]
  %s4 = inlined_call_operand.vmem [shape: f32[1,128], index: 4, kind: input, shape index: {}]
  %s5 = inlined_call_operand.vmem [shape: f32[8,128], index: 5, kind: output, shape index: {}]
  %s6 = sld [smem:[#allocation0]]
  $region30: #{rnn_for_text_forward.1} parent=0
    _
  %s8 = ssub.s32 1, %s6
  %s9 = scalar_select 0, %s8, %s6
  // Predicated region
  $region2: #{rnn_for_text_forward.1} parent=0 // pred_check
    _
  $region3: #{rnn_for_text_forward.1} parent=0 // pred_check_branch
    %11 = sbr.rel (0) target = $region5
  $region4: #{rnn_for_text_forward.1} parent=0 // pred_region
    _
  $region5: #{rnn_for_text_forward.1} parent=0 // pred_fallthru
    _
  // Predicated region
  $region6: #{rnn_for_text_forward.1} parent=0 // pred_check
    _
  $region7: #{rnn_for_text_forward.1} parent=0 // pred_check_branch
    %13 = sbr.rel (0) target = $region9
  $region8: #{rnn_for_text_forward.1} parent=0 // pred_region
    _
  $region9: #{rnn_for_text_forward.1} parent=0 // pred_fallthru
    _
  // Predicated region
  $region10: #{rnn_for_text_forward.1} parent=0 // pred_check
    _
  $region11: #{rnn_for_text_forward.1} parent=0 // pred_check_branch
    %15 = sbr.rel (0) target = $region13
  $region12: #{rnn_for_text_forward.1} parent=0 // pred_region
    _
  $region13: #{rnn_for_text_forward.1} parent=0 // pred_fallthru
    _
  // Predicated region
  $region14: #{rnn_for_text_forward.1} parent=0 // pred_check
    _
  $region15: #{rnn_for_text_forward.1} parent=0 // pred_check_branch
    %17 = sbr.rel (0) target = $region17
  $region16: #{rnn_for_text_forward.1} parent=0 // pred_region
    _
  $region17: #{rnn_for_text_forward.1} parent=0 // pred_fallthru
    _
  // Predicated region
  $region18: #{rnn_for_text_forward.1} parent=0 // pred_check
    _
  $region19: #{rnn_for_text_forward.1} parent=0 // pred_check_branch
    %19 = sbr.rel (0) target = $region21
  $region20: #{rnn_for_text_forward.1} parent=0 // pred_region
    _
  $region21: #{rnn_for_text_forward.1} parent=0 // pred_fallthru
    _
  %v20 = vld [vmem:[%s0] sm:$0xff]
  %v21 = vld [vmem:[%s0 + $0x8] sm:$0xff]
  %v22 = vpack.c.bf16 %v20, %v20
  %v23 = vpack.c.bf16 %v21, %v21
  %v24 = vld [vmem:[%s1] sm:$0xff]
  %v25 = vld [vmem:[%s1 + $0x8] sm:$0xff]
  %v26 = vld [vmem:[%s1 + $0x10] sm:$0xff]
  %v27 = vld [vmem:[%s1 + $0x18] sm:$0xff]
  %v28 = vld [vmem:[%s1 + $0x20] sm:$0xff]
  %v29 = vld [vmem:[%s1 + $0x28] sm:$0xff]
  %v30 = vld [vmem:[%s1 + $0x30] sm:$0xff]
  %v31 = vld [vmem:[%s1 + $0x38] sm:$0xff]
  %v32 = vld [vmem:[%s1 + $0x40] sm:$0xff]
  %v33 = vld [vmem:[%s1 + $0x48] sm:$0xff]
  %v34 = vld [vmem:[%s1 + $0x50] sm:$0xff]
  %v35 = vld [vmem:[%s1 + $0x58] sm:$0xff]
  %v36 = vld [vmem:[%s1 + $0x60] sm:$0xff]
  %v37 = vld [vmem:[%s1 + $0x68] sm:$0xff]
  %v38 = vld [vmem:[%s1 + $0x70] sm:$0xff]
  %v39 = vld [vmem:[%s1 + $0x78] sm:$0xff]
  %v40 = vld [vmem:[%s1 + $0x80] sm:$0xff]
  %v41 = vld [vmem:[%s1 + $0x88] sm:$0xff]
  %v42 = vld [vmem:[%s1 + $0x90] sm:$0xff]
  %v43 = vld [vmem:[%s1 + $0x98] sm:$0xff]
  %v44 = vld [vmem:[%s1 + $0xa0] sm:$0xff]
  %v45 = vld [vmem:[%s1 + $0xa8] sm:$0xff]
  %v46 = vld [vmem:[%s1 + $0xb0] sm:$0xff]
  %v47 = vld [vmem:[%s1 + $0xb8] sm:$0xff]
  %v48 = vld [vmem:[%s1 + $0xc0] sm:$0xff]
  %v49 = vld [vmem:[%s1 + $0xc8] sm:$0xff]
  %v50 = vld [vmem:[%s1 + $0xd0] sm:$0xff]
  %v51 = vld [vmem:[%s1 + $0xd8] sm:$0xff]
  %v52 = vld [vmem:[%s1 + $0xe0] sm:$0xff]
  %v53 = vld [vmem:[%s1 + $0xe8] sm:$0xff]
  %v54 = vld [vmem:[%s1 + $0xf0] sm:$0xff]
  %v55 = vld [vmem:[%s1 + $0xf8] sm:$0xff]
  %v56 = vld [vmem:[%s2] sm:$0x3]
  %v58 = vperm.slane %v56, 0
  %v59 = vperm.slane %v56, 1
  %v94 = vunpack.c.l.b16 %v24
  %v95 = vunpack.c.h.b16 %v24
  %v96 = vunpack.c.l.b16 %v25
  %v97 = vunpack.c.h.b16 %v25
  %v98 = vunpack.c.l.b16 %v26
  %v99 = vunpack.c.h.b16 %v26
  %v100 = vunpack.c.l.b16 %v27
  %v101 = vunpack.c.h.b16 %v27
  %v102 = vunpack.c.l.b16 %v28
  %v103 = vunpack.c.h.b16 %v28
  %v104 = vunpack.c.l.b16 %v29
  %v105 = vunpack.c.h.b16 %v29
  %v106 = vunpack.c.l.b16 %v30
  %v107 = vunpack.c.h.b16 %v30
  %v108 = vunpack.c.l.b16 %v31
  %v109 = vunpack.c.h.b16 %v31
  %v110 = vunpack.c.l.b16 %v32
  %v111 = vunpack.c.h.b16 %v32
  %v112 = vunpack.c.l.b16 %v33
  %v113 = vunpack.c.h.b16 %v33
  %v114 = vunpack.c.l.b16 %v34
  %v115 = vunpack.c.h.b16 %v34
  %v116 = vunpack.c.l.b16 %v35
  %v117 = vunpack.c.h.b16 %v35
  %v118 = vunpack.c.l.b16 %v36
  %v119 = vunpack.c.h.b16 %v36
  %v120 = vunpack.c.l.b16 %v37
  %v121 = vunpack.c.h.b16 %v37
  %v122 = vunpack.c.l.b16 %v38
  %v123 = vunpack.c.h.b16 %v38
  %v124 = vunpack.c.l.b16 %v39
  %v125 = vunpack.c.h.b16 %v39
  %v126 = vunpack.c.l.b16 %v40
  %v127 = vunpack.c.h.b16 %v40
  %v128 = vunpack.c.l.b16 %v41
  %v129 = vunpack.c.h.b16 %v41
  %v130 = vunpack.c.l.b16 %v42
  %v131 = vunpack.c.h.b16 %v42
  %v132 = vunpack.c.l.b16 %v43
  %v133 = vunpack.c.h.b16 %v43
  %v134 = vunpack.c.l.b16 %v44
  %v135 = vunpack.c.h.b16 %v44
  %v136 = vunpack.c.l.b16 %v45
  %v137 = vunpack.c.h.b16 %v45
  %v138 = vunpack.c.l.b16 %v46
  %v139 = vunpack.c.h.b16 %v46
  %v140 = vunpack.c.l.b16 %v47
  %v141 = vunpack.c.h.b16 %v47
  %v142 = vunpack.c.l.b16 %v48
  %v143 = vunpack.c.h.b16 %v48
  %v144 = vunpack.c.l.b16 %v49
  %v145 = vunpack.c.h.b16 %v49
  %v146 = vunpack.c.l.b16 %v50
  %v147 = vunpack.c.h.b16 %v50
  %v148 = vunpack.c.l.b16 %v51
  %v149 = vunpack.c.h.b16 %v51
  %v150 = vunpack.c.l.b16 %v52
  %v151 = vunpack.c.h.b16 %v52
  %v152 = vunpack.c.l.b16 %v53
  %v153 = vunpack.c.h.b16 %v53
  %v154 = vunpack.c.l.b16 %v54
  %v155 = vunpack.c.h.b16 %v54
  %v156 = vunpack.c.l.b16 %v55
  %v157 = vunpack.c.h.b16 %v55
  %v158 = vpack.c.b16 %v96, %v94
  %v159 = vpack.c.b16 %v97, %v95
  %v160 = vpack.c.b16 %v100, %v98
  %v161 = vpack.c.b16 %v101, %v99
  %v162 = vpack.c.b16 %v104, %v102
  %v163 = vpack.c.b16 %v105, %v103
  %v164 = vpack.c.b16 %v108, %v106
  %v165 = vpack.c.b16 %v109, %v107
  %v166 = vpack.c.b16 %v112, %v110
  %v167 = vpack.c.b16 %v113, %v111
  %v168 = vpack.c.b16 %v116, %v114
  %v169 = vpack.c.b16 %v117, %v115
  %v170 = vpack.c.b16 %v120, %v118
  %v171 = vpack.c.b16 %v121, %v119
  %v172 = vpack.c.b16 %v124, %v122
  %v173 = vpack.c.b16 %v125, %v123
  %v174 = vpack.c.b16 %v128, %v126
  %v175 = vpack.c.b16 %v129, %v127
  %v176 = vpack.c.b16 %v132, %v130
  %v177 = vpack.c.b16 %v133, %v131
  %v178 = vpack.c.b16 %v136, %v134
  %v179 = vpack.c.b16 %v137, %v135
  %v180 = vpack.c.b16 %v140, %v138
  %v181 = vpack.c.b16 %v141, %v139
  %v182 = vpack.c.b16 %v144, %v142
  %v183 = vpack.c.b16 %v145, %v143
  %v184 = vpack.c.b16 %v148, %v146
  %v185 = vpack.c.b16 %v149, %v147
  %v186 = vpack.c.b16 %v152, %v150
  %v187 = vpack.c.b16 %v153, %v151
  %v188 = vpack.c.b16 %v156, %v154
  %v189 = vpack.c.b16 %v157, %v155
  %222 = vmatpush.bf16.msra.mxu0 %v172
  %223 = vmatpush.bf16.msra.mxu0 %v170
  %224 = vmatpush.bf16.msra.mxu0 %v168
  %225 = vmatpush.bf16.msra.mxu0 %v166
  %226 = vmatpush.bf16.msra.mxu0 %v164
  %227 = vmatpush.bf16.msra.mxu0 %v162
  %228 = vmatpush.bf16.msra.mxu0 %v160
  %229 = vmatpush.bf16.msra.mxu0 %v158
  %230 = vmatmul.bf16.gmra.mxu0 %v22
  %v231 = vpop.f32.mrf.mxu0
  %v232 = vadd.f32 %v58, %v231
  %v233 = vpop.f32.mrf.mxu0
  %234 = vdwg.mxu0
  %235 = vmatpush.bf16.msra.mxu0 %v188
  %236 = vmatpush.bf16.msra.mxu0 %v186
  %237 = vmatpush.bf16.msra.mxu0 %v184
  %238 = vmatpush.bf16.msra.mxu0 %v182
  %239 = vmatpush.bf16.msra.mxu0 %v180
  %240 = vmatpush.bf16.msra.mxu0 %v178
  %241 = vmatpush.bf16.msra.mxu0 %v176
  %242 = vmatpush.bf16.msra.mxu0 %v174
  %243 = vmatmul.bf16.gmra.mxu0 %v23
  %v244 = vpop.f32.mrf.mxu0
  %v245 = vadd.f32 %v232, %v244
  %v246 = vpop.f32.mrf.mxu0
  %247 = vdwg.mxu0
  %248 = vmatpush.bf16.msra.mxu0 %v173
  %249 = vmatpush.bf16.msra.mxu0 %v171
  %250 = vmatpush.bf16.msra.mxu0 %v169
  %251 = vmatpush.bf16.msra.mxu0 %v167
  %252 = vmatpush.bf16.msra.mxu0 %v165
  %253 = vmatpush.bf16.msra.mxu0 %v163
  %254 = vmatpush.bf16.msra.mxu0 %v161
  %255 = vmatpush.bf16.msra.mxu0 %v159
  %256 = vmatmul.bf16.gmra.mxu0 %v22
  %v257 = vpop.f32.mrf.mxu0
  %v258 = vadd.f32 %v59, %v257
  %v259 = vpop.f32.mrf.mxu0
  %260 = vdwg.mxu0
  %261 = vmatpush.bf16.msra.mxu0 %v189
  %262 = vmatpush.bf16.msra.mxu0 %v187
  %263 = vmatpush.bf16.msra.mxu0 %v185
  %264 = vmatpush.bf16.msra.mxu0 %v183
  %265 = vmatpush.bf16.msra.mxu0 %v181
  %266 = vmatpush.bf16.msra.mxu0 %v179
  %267 = vmatpush.bf16.msra.mxu0 %v177
  %268 = vmatpush.bf16.msra.mxu0 %v175
  %269 = vmatmul.bf16.gmra.mxu0 %v23
  %v270 = vpop.f32.mrf.mxu0
  %v271 = vadd.f32 %v258, %v270
  %v272 = vpop.f32.mrf.mxu0
  %273 = vdwg.mxu0
  %v274 = vtanh.pop %v245
  %v275 = vtanh.pop %v271
  %v276 = vpack.c.bf16 %v274, %v274
  %v277 = vpack.c.bf16 %v275, %v275
  %v278 = vld [vmem:[%s3] sm:$0xf]
  %v279 = vld [vmem:[%s3 + $0x4] sm:$0xf]
  %v280 = vld [vmem:[%s3 + $0x8] sm:$0xf]
  %v281 = vld [vmem:[%s3 + $0xc] sm:$0xf]
  %v282 = vld [vmem:[%s3 + $0x10] sm:$0xf]
  %v283 = vld [vmem:[%s3 + $0x14] sm:$0xf]
  %v284 = vld [vmem:[%s3 + $0x18] sm:$0xf]
  %v285 = vld [vmem:[%s3 + $0x1c] sm:$0xf]
  %v286 = vld [vmem:[%s3 + $0x20] sm:$0xf]
  %v287 = vld [vmem:[%s3 + $0x24] sm:$0xf]
  %v288 = vld [vmem:[%s3 + $0x28] sm:$0xf]
  %v289 = vld [vmem:[%s3 + $0x2c] sm:$0xf]
  %v290 = vld [vmem:[%s3 + $0x30] sm:$0xf]
  %v291 = vld [vmem:[%s3 + $0x34] sm:$0xf]
  %v292 = vld [vmem:[%s3 + $0x38] sm:$0xf]
  %v293 = vld [vmem:[%s3 + $0x3c] sm:$0xf]
  %v294 = vld [vmem:[%s3 + $0x40] sm:$0xf]
  %v295 = vld [vmem:[%s3 + $0x44] sm:$0xf]
  %v296 = vld [vmem:[%s3 + $0x48] sm:$0xf]
  %v297 = vld [vmem:[%s3 + $0x4c] sm:$0xf]
  %v298 = vld [vmem:[%s3 + $0x50] sm:$0xf]
  %v299 = vld [vmem:[%s3 + $0x54] sm:$0xf]
  %v300 = vld [vmem:[%s3 + $0x58] sm:$0xf]
  %v301 = vld [vmem:[%s3 + $0x5c] sm:$0xf]
  %v302 = vld [vmem:[%s3 + $0x60] sm:$0xf]
  %v303 = vld [vmem:[%s3 + $0x64] sm:$0xf]
  %v304 = vld [vmem:[%s3 + $0x68] sm:$0xf]
  %v305 = vld [vmem:[%s3 + $0x6c] sm:$0xf]
  %v306 = vld [vmem:[%s3 + $0x70] sm:$0xf]
  %v307 = vld [vmem:[%s3 + $0x74] sm:$0xf]
  %v308 = vld [vmem:[%s3 + $0x78] sm:$0xf]
  %v309 = vld [vmem:[%s3 + $0x7c] sm:$0xf]
  %v310 = vld [vmem:[%s4] sm:$0x1]
  %v312 = vperm.slane %v310, 0
  %v346 = vunpack.c.l.b16 %v278
  %v347 = vunpack.c.l.b16 %v279
  %v348 = vunpack.c.l.b16 %v280
  %v349 = vunpack.c.l.b16 %v281
  %v350 = vunpack.c.l.b16 %v282
  %v351 = vunpack.c.l.b16 %v283
  %v352 = vunpack.c.l.b16 %v284
  %v353 = vunpack.c.l.b16 %v285
  %v354 = vunpack.c.l.b16 %v286
  %v355 = vunpack.c.l.b16 %v287
  %v356 = vunpack.c.l.b16 %v288
  %v357 = vunpack.c.l.b16 %v289
  %v358 = vunpack.c.l.b16 %v290
  %v359 = vunpack.c.l.b16 %v291
  %v360 = vunpack.c.l.b16 %v292
  %v361 = vunpack.c.l.b16 %v293
  %v362 = vunpack.c.l.b16 %v294
  %v363 = vunpack.c.l.b16 %v295
  %v364 = vunpack.c.l.b16 %v296
  %v365 = vunpack.c.l.b16 %v297
  %v366 = vunpack.c.l.b16 %v298
  %v367 = vunpack.c.l.b16 %v299
  %v368 = vunpack.c.l.b16 %v300
  %v369 = vunpack.c.l.b16 %v301
  %v370 = vunpack.c.l.b16 %v302
  %v371 = vunpack.c.l.b16 %v303
  %v372 = vunpack.c.l.b16 %v304
  %v373 = vunpack.c.l.b16 %v305
  %v374 = vunpack.c.l.b16 %v306
  %v375 = vunpack.c.l.b16 %v307
  %v376 = vunpack.c.l.b16 %v308
  %v377 = vunpack.c.l.b16 %v309
  %v378 = vpack.c.b16 %v347, %v346
  %v379 = vpack.c.b16 %v349, %v348
  %v380 = vpack.c.b16 %v351, %v350
  %v381 = vpack.c.b16 %v353, %v352
  %v382 = vpack.c.b16 %v355, %v354
  %v383 = vpack.c.b16 %v357, %v356
  %v384 = vpack.c.b16 %v359, %v358
  %v385 = vpack.c.b16 %v361, %v360
  %v386 = vpack.c.b16 %v363, %v362
  %v387 = vpack.c.b16 %v365, %v364
  %v388 = vpack.c.b16 %v367, %v366
  %v389 = vpack.c.b16 %v369, %v368
  %v390 = vpack.c.b16 %v371, %v370
  %v391 = vpack.c.b16 %v373, %v372
  %v392 = vpack.c.b16 %v375, %v374
  %v393 = vpack.c.b16 %v377, %v376
  %410 = vmatpush.bf16.msra.mxu0 %v385
  %411 = vmatpush.bf16.msra.mxu0 %v384
  %412 = vmatpush.bf16.msra.mxu0 %v383
  %413 = vmatpush.bf16.msra.mxu0 %v382
  %414 = vmatpush.bf16.msra.mxu0 %v381
  %415 = vmatpush.bf16.msra.mxu0 %v380
  %416 = vmatpush.bf16.msra.mxu0 %v379
  %417 = vmatpush.bf16.msra.mxu0 %v378
  %418 = vmatmul.bf16.gmra.mxu0 %v276
  %v419 = vpop.f32.mrf.mxu0
  %v420 = vadd.f32 %v312, %v419
  %v421 = vpop.f32.mrf.mxu0
  %422 = vdwg.mxu0
  %423 = vmatpush.bf16.msra.mxu0 %v393
  %424 = vmatpush.bf16.msra.mxu0 %v392
  %425 = vmatpush.bf16.msra.mxu0 %v391
  %426 = vmatpush.bf16.msra.mxu0 %v390
  %427 = vmatpush.bf16.msra.mxu0 %v389
  %428 = vmatpush.bf16.msra.mxu0 %v388
  %429 = vmatpush.bf16.msra.mxu0 %v387
  %430 = vmatpush.bf16.msra.mxu0 %v386
  %431 = vmatmul.bf16.gmra.mxu0 %v277
  %v432 = vpop.f32.mrf.mxu0
  %v433 = vadd.f32 %v420, %v432
  %v434 = vpop.f32.mrf.mxu0
  %435 = vdwg.mxu0
  %436 = vst [vmem:[%s5] sm:$0xff] %v433
  // Predicated region
  $region22: #{rnn_for_text_forward.1} parent=0 // pred_check
    _
  $region23: #{rnn_for_text_forward.1} parent=0 // pred_check_branch
    %438 = sbr.rel (0) target = $region25
  $region24: #{rnn_for_text_forward.1} parent=0 // pred_region
    _
  $region25: #{rnn_for_text_forward.1} parent=0 // pred_fallthru
    _
  // Predicated region
  $region26: #{rnn_for_text_forward.1} parent=0 // pred_check
    _
  $region27: #{rnn_for_text_forward.1} parent=0 // pred_check_branch
    %440 = sbr.rel (0) target = $region29
  $region28: #{rnn_for_text_forward.1} parent=0 // pred_region
    _
  $region29: #{rnn_for_text_forward.1} parent=0 // pred_fallthru
    _

</llo_original>
